<compile_context>
chip_gen: v7x
topology: tpu7x:2x2x1
jax: 0.10.0
libtpu: 0.0.40
codegen_flags: <defaults>
</compile_context>

<pallas_src>
import jax
import jax.numpy as jnp
from jax.experimental import pallas as pl
from jax.experimental.pallas import tpu as pltpu


_LANE = 128


def _sublane_multiple(dtype) -> int:
    """Rows-per-vreg granularity: 8 for 4-byte, 16 for 2-byte, 32 for 1-byte."""
    itemsize = jnp.dtype(dtype).itemsize
    if itemsize >= 4:
        return 8
    if itemsize == 2:
        return 16
    return 32


def _round_up(a: int, m: int) -> int:
    return ((a + m - 1) // m) * m


def _hswish_math(x):
    # Weakly-typed python scalars keep x's (floating) dtype.
    return x * jnp.clip(x + 3.0, 0.0, 6.0) * (1.0 / 6.0)


def _hswish_jnp(x):
    """Reference-style elementwise compute, dtype-safe (used for tiny tails)."""
    if jnp.issubdtype(x.dtype, jnp.floating):
        return _hswish_math(x)
    return _hswish_math(x.astype(jnp.float32)).astype(x.dtype)


def _hswish_kernel(x_ref, o_ref):
    x = x_ref[...]
    if jnp.issubdtype(x.dtype, jnp.floating):
        o_ref[...] = _hswish_math(x)
    else:
        # Integer inputs: upcast so +3 / clip / *(1/6) are done in f32.
        o_ref[...] = _hswish_math(x.astype(jnp.float32)).astype(o_ref.dtype)


def _vmem_capacity_bytes() -> int:
    try:
        return int(pltpu.get_tpu_info().vmem_capacity_bytes)
    except Exception:
        return 64 << 20  # conservative default (v7x-sized VMEM)


def _hswish_2d(x2d: jax.Array) -> jax.Array:
    """Run the Pallas kernel on a lane-dense (rows, cols) slab (cols % 128 == 0)."""
    rows, cols = x2d.shape
    dtype = x2d.dtype
    itemsize = jnp.dtype(dtype).itemsize
    sub = _sublane_multiple(dtype)
    row_bytes = cols * itemsize

    vmem_cap = _vmem_capacity_bytes()
    # ~8 MiB tile cap (gated by reported VMEM capacity): per-step fixed cost is
    # negligible on every generation, and 4 x tile + scratch fits 64 MiB VMEM.
    tile_cap = max(row_bytes, min(8 << 20, vmem_cap // 8))

    if rows <= sub:
        tr = rows                                   # block == full rows dim
    else:
        rows_al = (rows // sub) * sub
        tr_cap = max(sub, min((tile_cap // row_bytes) // sub * sub, rows_al))
        steps = pl.cdiv(rows, tr_cap)
        # Prefer >= 2 and an even number of roughly-equal steps: overlaps input
        # and output DMA, and balances the "parallel" grid axis across v7x's
        # two TensorCores (harmless on single-TC v5e/v6e).
        if rows >= 2 * sub:
            steps = max(steps, 2)
            steps += steps % 2
        tr = _round_up(pl.cdiv(rows, steps), sub)
        tr = max(sub, min(tr, tr_cap))

    grid = (pl.cdiv(rows, tr),)
    tile_bytes = tr * row_bytes
    # 2 buffers x (in + out) = 4 x tile + headroom; keep >= 32 MiB (above the
    # v5e 16 MiB scoped default) and <= 48 MiB (never exceeds v7x 64 MiB VMEM).
    vmem_limit = int(min(48 << 20, vmem_cap * 3 // 4,
                         max(32 << 20, 6 * tile_bytes)))

    n = rows * cols
    return pl.pallas_call(
        _hswish_kernel,
        out_shape=jax.ShapeDtypeStruct((rows, cols), dtype),
        grid_spec=pltpu.PrefetchScalarGridSpec(
            num_scalar_prefetch=0,
            grid=grid,
            in_specs=[pl.BlockSpec((tr, cols), lambda i: (i, 0))],
            out_specs=pl.BlockSpec((tr, cols), lambda i: (i, 0)),
        ),
        compiler_params=pltpu.CompilerParams(
            dimension_semantics=("parallel",),
            vmem_limit_bytes=vmem_limit,
        ),
        cost_estimate=pl.CostEstimate(
            flops=5 * n,
            transcendentals=0,
            bytes_accessed=2 * n * itemsize,
        ),
    )(x2d)


def hswish(x: jax.Array) -> jax.Array:
    """Elementwise hard-swish on an arbitrarily-shaped array (NCHW expected)."""
    orig_shape = x.shape
    flat = x.reshape(-1)
    n = flat.shape[0]
    if n == 0:
        return x
    if n < _LANE:
        # Tiny tensor: a kernel launch is not worth it.
        return _hswish_jnp(flat).reshape(orig_shape)

    # ---- fast path: numel divisible by a lane-dense width -> 1 read + 1 write
    cols = None
    for cand in (8192, 4096, 2048, 1024, 512, 256, 128):
        if n % cand == 0:
            cols = cand
            break
    if cols is not None:
        out2d = _hswish_2d(flat.reshape(n // cols, cols))
        return out2d.reshape(orig_shape)

    # ---- ragged path (numel % 128 != 0, rare): kernel on the 128-aligned
    # prefix, <128-element tail in plain jnp, stitched with one concatenate.
    # Avoids the former full-tensor jnp.pad + full-tensor output slice.
    n_main = (n // _LANE) * _LANE
    cols = _LANE
    for cand in (8192, 4096, 2048, 1024, 512, 256):
        if n_main % cand == 0:
            cols = cand
            break
    out_main = _hswish_2d(flat[:n_main].reshape(n_main // cols, cols)).reshape(-1)
    out_tail = _hswish_jnp(flat[n_main:])
    return jnp.concatenate([out_main, out_tail]).reshape(orig_shape)


def _hswish_ref(x):
    return x * jnp.clip(x + 3.0, 0.0, 6.0) / 6.0


def _check(x, atol, rtol):
    y = hswish(x)
    jax.block_until_ready(y)
    assert y.shape == x.shape and y.dtype == x.dtype
    y_ref = _hswish_ref(x.astype(jnp.float32))
    assert jnp.allclose(y.astype(jnp.float32), y_ref, atol=atol, rtol=rtol), (
        f"mismatch for shape {x.shape} dtype {x.dtype}")


if __name__ == "__main__":
    key = jax.random.PRNGKey(0)
    k0, k1, k2, k3, k4 = jax.random.split(key, 5)

    # 1) Module-spec shape: NCHW (2, 4, 16, 16), f32 — aligned fast path.
    x0 = jax.random.normal(k0, (2, 4, 16, 16), dtype=jnp.float32) * 4.0
    _check(x0, atol=1e-6, rtol=1e-6)

    # 2) Unaligned numel (ragged fallback: aligned prefix + jnp tail).
    x1 = jax.random.normal(k1, (3, 5, 7, 11), dtype=jnp.float32) * 4.0
    _check(x1, atol=1e-6, rtol=1e-6)

    # 3) Multi-step, balanced grid (f32).
    x2 = jax.random.normal(k2, (8, 64, 30, 32), dtype=jnp.float32) * 4.0
    _check(x2, atol=1e-6, rtol=1e-6)

    # 4) bf16 (dtype-aware sublane alignment).
    x3 = (jax.random.normal(k3, (2, 4, 16, 16), dtype=jnp.float32) * 4.0
          ).astype(jnp.bfloat16)
    _check(x3, atol=5e-2, rtol=2e-2)

    # 5) Tiny tensor (< 128 elements, pure jnp path).
    x4 = jax.random.normal(k4, (3, 7), dtype=jnp.float32) * 4.0
    _check(x4, atol=1e-6, rtol=1e-6)

    print("KERNEL_OK")
</pallas_src>

<mosaic_0001>
module attributes {stable_mosaic.version = 11 : i64} {
  func.func @_hswish_kernel(%arg0: i32, %arg1: memref<1x2048xf32, #tpu.memory_space<vmem>>, %arg2: memref<1x2048xf32, #tpu.memory_space<vmem>>) attributes {dimension_semantics = [#tpu.dimension_semantics<parallel>], iteration_bounds = array<i64: 1>, scalar_prefetch = 0 : i64, scratch_operands = 0 : i64, tpu.core_type = #tpu.core_type<tc>, window_params = [{transform_indices = @transform_0, window_bounds = array<i64: 1, 2048>}, {transform_indices = @transform_1, window_bounds = array<i64: 1, 2048>}]} {
    %c0 = arith.constant 0 : index
    %c0_0 = arith.constant 0 : index
    %0 = vector.load %arg1[%c0, %c0_0] : memref<1x2048xf32, #tpu.memory_space<vmem>>, vector<1x2048xf32>
    %cst = arith.constant 3.000000e+00 : f32
    %1 = vector.broadcast %cst : f32 to vector<1x2048xf32>
    %2 = arith.addf %0, %1 : vector<1x2048xf32>
    %cst_1 = arith.constant 0.000000e+00 : f32
    %cst_2 = arith.constant 6.000000e+00 : f32
    %3 = vector.broadcast %cst_1 : f32 to vector<1x2048xf32>
    %4 = arith.maximumf %3, %2 : vector<1x2048xf32>
    %5 = vector.broadcast %cst_2 : f32 to vector<1x2048xf32>
    %6 = arith.minimumf %5, %4 : vector<1x2048xf32>
    %7 = arith.mulf %0, %6 : vector<1x2048xf32>
    %cst_3 = arith.constant 0.166666672 : f32
    %8 = vector.broadcast %cst_3 : f32 to vector<1x2048xf32>
    %9 = arith.mulf %7, %8 : vector<1x2048xf32>
    %c0_4 = arith.constant 0 : index
    %c0_5 = arith.constant 0 : index
    %10 = vector.load %arg2[%c0_4, %c0_5] : memref<1x2048xf32, #tpu.memory_space<vmem>>, vector<1x2048xf32>
    tpu.vector_store %arg2[%c0_4, %c0_5], %9 {strides = array<i32>} : memref<1x2048xf32, #tpu.memory_space<vmem>>, vector<1x2048xf32>,
    return
  }
  func.func @transform_0(%arg0: i32) -> (i32, i32) {
    %c0_i32 = arith.constant 0 : i32
    %c0_i32_0 = arith.constant 0 : i32
    return %arg0, %c0_i32 : i32, i32
  }
  func.func @transform_1(%arg0: i32) -> (i32, i32) {
    %c0_i32 = arith.constant 0 : i32
    %c0_i32_0 = arith.constant 0 : i32
    return %arg0, %c0_i32 : i32, i32
  }
}

</mosaic_0001>

<llo_original>
// kernel: tpu_custom_call.1
$region0: #{tpu_custom_call.1}
  #allocation0 [shape = 'u32[]', space=smem, size = 0x4, offset = 0x4, fixed_abs, tag = 'smem constant byte address 0x4 - core index']
  #allocation1 [shape = 'u32[144,128]{1,0:T(1,128)}', space=vmem, size = 0x12000, scoped, tag = 'internal scratch']
  %s0 = inlined_call_operand.hbm [shape: f32[1,2048], index: 0, kind: input, shape index: {}]
  %s1 = inlined_call_operand.hbm [shape: f32[1,2048], index: 1, kind: output, shape index: {}]
  %s2 = sld [smem:[#allocation0]]
  $region18: #{tpu_custom_call.1} parent=0
    _
  %s4 = ssub.s32 1, %s2
  %s5 = scalar_select 0, %s4, %s2
  $region1: #{tpu_custom_call.1} parent=0
    #allocation2 [shape = 'u8[8192]{0}', space=vmem, size = 0x2000, scoped, tag = 'input window, operand 0, single buffered']
    #allocation3 [shape = 's32[1]{0}', space=sflag, size = 0x4, scoped, tag = 'scoped memory for tpu_custom_call.1']
    #allocation4 [shape = 's32[1]{0}', space=sflag, size = 0x4, scoped, tag = 'scoped memory for tpu_custom_call.1']
    #allocation5 [shape = 'u8[8192]{0}', space=vmem, size = 0x2000, scoped, tag = 'output window, operand 0, single buffered']
    %6 = vsyncpa [#allocation3], 0
    %7 = vsyncpa [#allocation4], 0
    // Predicated region
    $region2: #{tpu_custom_call.1} parent=1 // pred_check
      _
    $region3: #{tpu_custom_call.1} parent=1 // pred_check_branch
      %9 = sbr.rel (0) target = $region5
    $region4: #{tpu_custom_call.1} parent=1 // pred_region
      %s11 = ssub.s32 256, 256
      %12 = vsyncadd [#allocation3], %s11
      %s14 = sshll.u32 [#allocation2], 4
      %s15 = int_to_ptr.vmem [resolvable:$true] %s14
      %17 = dma.hbm_to_vmem [thread:$0]  %s0, 256, %s15, [#allocation3]
    $region5: #{tpu_custom_call.1} parent=1 // pred_fallthru
      _
    // Predicated region
    $region6: #{tpu_custom_call.1} parent=1 // pred_check
      _
    $region7: #{tpu_custom_call.1} parent=1 // pred_check_branch
      %19 = sbr.rel (0) target = $region9
    $region8: #{tpu_custom_call.1} parent=1 // pred_region
      %20 = dma.done [#allocation3], 256
    $region9: #{tpu_custom_call.1} parent=1 // pred_fallthru
      _
    %v21 = vld [vmem:[#allocation2] sm:$0xff]
    %v22 = vld [vmem:[#allocation2 + $0x8] sm:$0xff]
    %v23 = vadd.f32 %v21, 3.0
    %v24 = vadd.f32 %v22, 3.0
    %v25 = vmax.f32 %v23, 0.0
    %v26 = vmax.f32 %v24, 0.0
    %v27 = vmin.f32 %v25, 6.0
    %v28 = vmin.f32 %v26, 6.0
    %v29 = vmul.f32 %v21, %v27
    %v30 = vmul.f32 %v22, %v28
    %v31 = vmul.f32 %v29, 0.16666667
    %v32 = vmul.f32 %v30, 0.16666667
    %33 = vst [vmem:[#allocation5] sm:$0xff] %v31
    %34 = vst [vmem:[#allocation5 + $0x8] sm:$0xff] %v32
    // Predicated region
    $region10: #{tpu_custom_call.1} parent=1 // pred_check
      _
    $region11: #{tpu_custom_call.1} parent=1 // pred_check_branch
      %36 = sbr.rel (0) target = $region13
    $region12: #{tpu_custom_call.1} parent=1 // pred_region
      %s38 = ssub.s32 256, 256
      %39 = vsyncadd [#allocation4], %s38
      %s41 = sshll.u32 [#allocation5], 4
      %s42 = int_to_ptr.vmem [resolvable:$true] %s41
      %44 = dma.vmem_to_hbm [thread:$0]  %s42, 256, %s1, [#allocation4]
    $region13: #{tpu_custom_call.1} parent=1 // pred_fallthru
      _
    // Predicated region
    $region14: #{tpu_custom_call.1} parent=1 // pred_check
      _
    $region15: #{tpu_custom_call.1} parent=1 // pred_check_branch
      %46 = sbr.rel (0) target = $region17
    $region16: #{tpu_custom_call.1} parent=1 // pred_region
      %47 = dma.done [#allocation4], 256
    $region17: #{tpu_custom_call.1} parent=1 // pred_fallthru
      _
    %48 = vsyncpa [#allocation3], 1
    %49 = vsyncpa [#allocation4], 1

</llo_original>
